<compile_context>
chip_gen: v6e
topology: v6e:2x2x1
jax: 0.10.0
libtpu: 0.0.40
codegen_flags: <defaults>
</compile_context>

<pallas_src>
import functools
import math

import jax
import jax.numpy as jnp
from jax.experimental import pallas as pl
from jax.experimental.pallas import tpu as pltpu

_BN_EPS = 1e-5


def _round_up(x, m):
    return (x + m - 1) // m * m


def _resident_spec(shape):
    # Full-array block whose index is invariant along the K grid axis, so
    # Pallas DMAs it once and keeps it resident in VMEM across all k steps.
    return pl.BlockSpec(shape, lambda k: (0,) * len(shape))


def _choose_tk(p_in, target=512):
    # Largest multiple of 128 that divides p_in and is <= target.
    tk = min(p_in, target)
    while p_in % tk:
        tk -= 128
    return tk


def _vmem_cap_bytes():
    try:
        kind = jax.devices()[0].device_kind.lower()
    except Exception:
        kind = ""
    if "v7" in kind or "7x" in kind:
        return 48 << 20          # v7x: 64 MiB physical VMEM per TC
    return 100 << 20             # v5e / v6e: 128 MiB physical VMEM


# ------------------------- fused kernel -------------------------

def _fused_dnn_kernel(*refs, num_hidden, apply_sigmoid, inv_n):
    """refs layout:
      num_hidden > 0:
        (x_tile, w0_tile, gamma0, beta0,
         [w_i, gamma_i, beta_i] for i in 1..num_hidden-1,
         w_last, b_last, out, acc)
      num_hidden == 0:
        (x_tile, w_last_tile, b_last, out, acc)

    Grid axis 0 tiles the flattened-input (K) dimension of the first matmul;
    everything after it runs once under pl.when(k == last).
    """
    x_ref = refs[0]
    o_ref = refs[-2]
    acc_ref = refs[-1]
    act_dtype = refs[1].dtype
    k = pl.program_id(0)

    @pl.when(k == 0)
    def _init():
        acc_ref[...] = jnp.zeros_like(acc_ref)

    # K-tiled first-layer matmul, f32 accumulation in VMEM scratch.
    acc_ref[...] += jnp.dot(x_ref[...], refs[1][...],
                            preferred_element_type=jnp.float32)

    @pl.when(k == pl.num_programs(0) - 1)
    def _epilogue():
        y = acc_ref[...]
        r = 2
        h = None
        for i in range(num_hidden):
            if i > 0:
                w_ref = refs[r]
                r += 1
                y = jnp.dot(h, w_ref[...], preferred_element_type=jnp.float32)
            g_ref, b_ref = refs[r], refs[r + 1]
            r += 2
            # Single-pass batch statistics (sum & sum-of-squares), then fold
            # BatchNorm into one per-feature scale/shift on (1, F) vectors.
            s1 = jnp.sum(y, axis=0, keepdims=True)
            s2 = jnp.sum(y * y, axis=0, keepdims=True)
            mean = s1 * inv_n
            var = jnp.maximum(s2 * inv_n - mean * mean, 0.0)
            scale = g_ref[...] * jax.lax.rsqrt(var + _BN_EPS)
            shift = b_ref[...] - mean * scale
            # Full-tensor work is just FMA + ReLU, back to MXU dtype.
            h = jnp.maximum(y * scale + shift, 0.0).astype(act_dtype)
        if num_hidden > 0:
            w_ref, b_ref = refs[r], refs[r + 1]
            y = jnp.dot(h, w_ref[...],
                        preferred_element_type=jnp.float32) + b_ref[...]
        else:
            y = y + refs[r][...]
        if apply_sigmoid:
            y = jax.nn.sigmoid(y)
        o_ref[...] = y                      # lane-dense (last dim % 128 == 0)


# ------------------------- params -------------------------

def init_dnn1d_params(key, input_size, output_size, hidden_layers,
                      usage="regression", weight_dtype=jnp.bfloat16):
    """Init mirroring nn.Linear's U(-1/sqrt(fan_in), 1/sqrt(fan_in)).

    Weights are stored pre-transposed to (f_in, f_out), zero-padded so every
    feature dimension is a multiple of 128 lanes, and cast to `weight_dtype`.
    gamma/beta (BatchNorm1d affine) and the final bias stay in f32.
    """
    sizes = [input_size] + list(hidden_layers) + [output_size]
    padded = [_round_up(s, 128) for s in sizes]
    layers = []
    for idx in range(len(sizes) - 1):
        f_in, f_out = sizes[idx], sizes[idx + 1]
        p_in, p_out = padded[idx], padded[idx + 1]
        key, kw, kb = jax.random.split(key, 3)
        bound = 1.0 / math.sqrt(f_in)
        w = jax.random.uniform(kw, (f_in, f_out), jnp.float32, -bound, bound)
        w = jnp.pad(w, ((0, p_in - f_in), (0, p_out - f_out))).astype(weight_dtype)
        if idx < len(sizes) - 2:
            # Hidden layer: Linear bias dropped (cancelled by batch-stat BN).
            gamma = jnp.pad(jnp.ones((1, f_out), jnp.float32),
                            ((0, 0), (0, p_out - f_out)))
            beta = jnp.zeros((1, p_out), jnp.float32)
            layers.append({"w": w, "gamma": gamma, "beta": beta})
        else:
            b = jax.random.uniform(kb, (1, f_out), jnp.float32, -bound, bound)
            b = jnp.pad(b, ((0, 0), (0, p_out - f_out)))
            layers.append({"w": w, "b": b})
    return {"layers": layers, "usage": usage,
            "input_size": input_size, "output_size": output_size,
            "padded_input": padded[0]}


# ------------------------- forward -------------------------

def dnn1d_forward(params, x):
    """Forward pass matching DNN1DNet.forward (training-mode BatchNorm)."""
    n = x.shape[0]
    h = x.reshape(n, -1).astype(jnp.float32)            # nn.Flatten()
    if h.shape[1] != params["input_size"]:
        raise ValueError(f"flattened size {h.shape[1]} != {params['input_size']}")

    layers = params["layers"]
    wdt = layers[0]["w"].dtype
    p_in = params["padded_input"]
    h = jnp.pad(h, ((0, 0), (0, p_in - h.shape[1]))).astype(wdt)

    num_hidden = len(layers) - 1
    apply_sigmoid = (params["output_size"] == 1
                     and params["usage"] == "classification")

    w0 = layers[0]["w"]
    f1_pad = w0.shape[1]
    out_pad = layers[-1]["w"].shape[1]

    inputs = [h, w0]
    if num_hidden > 0:
        inputs += [layers[0]["gamma"], layers[0]["beta"]]
        for lyr in layers[1:-1]:
            inputs += [lyr["w"], lyr["gamma"], lyr["beta"]]
        inputs += [layers[-1]["w"], layers[-1]["b"]]
    else:
        inputs += [layers[-1]["b"]]

    # K tiling of the first (largest) matmul.
    tk = _choose_tk(p_in)
    grid = (p_in // tk,)

    # VMEM budget: streamed tiles are double-buffered; everything else resident.
    x_tile_bytes = n * tk * h.dtype.itemsize
    w0_tile_bytes = tk * f1_pad * w0.dtype.itemsize
    resident_bytes = sum(a.size * a.dtype.itemsize for a in inputs[2:])
    out_bytes = n * out_pad * 4
    acc_bytes = n * f1_pad * 4
    needed = 2 * (x_tile_bytes + w0_tile_bytes) + resident_bytes + out_bytes + acc_bytes
    vmem_limit = min(_vmem_cap_bytes(),
                     max(int(1.5 * needed) + (4 << 20), 16 << 20))

    in_specs = ([pl.BlockSpec((n, tk), lambda k: (0, k)),        # x: K-tiled
                 pl.BlockSpec((tk, f1_pad), lambda k: (k, 0))]   # w0: K-tiled
                + [_resident_spec(a.shape) for a in inputs[2:]])

    out = pl.pallas_call(
        functools.partial(_fused_dnn_kernel,
                          num_hidden=num_hidden,
                          apply_sigmoid=apply_sigmoid,
                          inv_n=1.0 / n),
        out_shape=jax.ShapeDtypeStruct((n, out_pad), jnp.float32),
        grid=grid,
        in_specs=in_specs,
        out_specs=pl.BlockSpec((n, out_pad), lambda k: (0, 0)),
        scratch_shapes=[pltpu.VMEM((n, f1_pad), jnp.float32)],
        compiler_params=pltpu.CompilerParams(
            dimension_semantics=("arbitrary",),
            vmem_limit_bytes=vmem_limit),
    )(*inputs)
    return out[:, :params["output_size"]]


# ------------------------- pure-JAX reference (same padded bf16 params) -------

def dnn1d_reference(params, x):
    n = x.shape[0]
    h = x.reshape(n, -1).astype(jnp.float32)
    layers = params["layers"]
    wdt = layers[0]["w"].dtype
    p_in = params["padded_input"]
    h = jnp.pad(h, ((0, 0), (0, p_in - h.shape[1]))).astype(wdt)
    for lyr in layers[:-1]:
        y = jnp.dot(h, lyr["w"], preferred_element_type=jnp.float32)
        mean = jnp.mean(y, axis=0, keepdims=True)
        var = jnp.mean(jnp.square(y - mean), axis=0, keepdims=True)
        y = (y - mean) * jax.lax.rsqrt(var + _BN_EPS)
        y = y * lyr["gamma"] + lyr["beta"]
        h = jnp.maximum(y, 0.0).astype(wdt)
    y = jnp.dot(h, layers[-1]["w"],
                preferred_element_type=jnp.float32) + layers[-1]["b"]
    if params["output_size"] == 1 and params["usage"] == "classification":
        y = jax.nn.sigmoid(y)
    return y[:, :params["output_size"]]


# ------------------------- demo -------------------------

if __name__ == "__main__":
    key = jax.random.PRNGKey(0)
    key, kx = jax.random.split(key)

    # Small demo shapes; batch is a multiple of 16 for full bf16 sublane packing.
    batch, n0, n1 = 16, 4, 8
    input_size = n0 * n1
    hidden_layers = [64, 32]

    x = jax.random.normal(kx, (batch, n0, n1), jnp.float32)

    # Regression head (8 outputs, no sigmoid).
    key, kp = jax.random.split(key)
    params_reg = init_dnn1d_params(kp, input_size, 8, hidden_layers,
                                   usage="regression")
    out_reg = dnn1d_forward(params_reg, x)
    jax.block_until_ready(out_reg)
    assert out_reg.shape == (batch, 8), out_reg.shape
    ref_reg = dnn1d_reference(params_reg, x)
    assert bool(jnp.allclose(out_reg, ref_reg, rtol=5e-2, atol=5e-2))

    # Binary-classification head (1 output -> fused sigmoid).
    key, kp = jax.random.split(key)
    params_cls = init_dnn1d_params(kp, input_size, 1, hidden_layers,
                                   usage="classification")
    out_cls = dnn1d_forward(params_cls, x)
    jax.block_until_ready(out_cls)
    assert out_cls.shape == (batch, 1), out_cls.shape
    assert bool(jnp.all((out_cls >= 0.0) & (out_cls <= 1.0)))

    # No hidden layers (pure Linear head) path.
    key, kp = jax.random.split(key)
    params_lin = init_dnn1d_params(kp, input_size, 4, [], usage="regression")
    out_lin = dnn1d_forward(params_lin, x)
    jax.block_until_ready(out_lin)
    assert out_lin.shape == (batch, 4), out_lin.shape
    ref_lin = dnn1d_reference(params_lin, x)
    assert bool(jnp.allclose(out_lin, ref_lin, rtol=5e-2, atol=5e-2))

    print("KERNEL_OK")
</pallas_src>

<mosaic_0001>
module attributes {stable_mosaic.version = 11 : i64} {
  func.func @_fused_dnn_kernel(%arg0: i32, %arg1: memref<16x128xbf16, #tpu.memory_space<vmem>>, %arg2: memref<128x128xbf16, #tpu.memory_space<vmem>>, %arg3: memref<1x128xf32, #tpu.memory_space<vmem>>, %arg4: memref<1x128xf32, #tpu.memory_space<vmem>>, %arg5: memref<128x128xbf16, #tpu.memory_space<vmem>>, %arg6: memref<1x128xf32, #tpu.memory_space<vmem>>, %arg7: memref<1x128xf32, #tpu.memory_space<vmem>>, %arg8: memref<128x128xbf16, #tpu.memory_space<vmem>>, %arg9: memref<1x128xf32, #tpu.memory_space<vmem>>, %arg10: memref<16x128xf32, #tpu.memory_space<vmem>>, %arg11: memref<16x128xf32, #tpu.memory_space<vmem>>) attributes {dimension_semantics = [#tpu.dimension_semantics<arbitrary>], iteration_bounds = array<i64: 1>, scalar_prefetch = 0 : i64, scratch_operands = 1 : i64, tpu.core_type = #tpu.core_type<tc>, window_params = [{transform_indices = @transform_0, window_bounds = array<i64: 16, 128>}, {transform_indices = @transform_1, window_bounds = array<i64: 128, 128>}, {pipeline_mode = #tpu.pipeline_mode<synchronous>, transform_indices = @transform_2, window_bounds = array<i64: 1, 128>}, {pipeline_mode = #tpu.pipeline_mode<synchronous>, transform_indices = @transform_3, window_bounds = array<i64: 1, 128>}, {pipeline_mode = #tpu.pipeline_mode<synchronous>, transform_indices = @transform_4, window_bounds = array<i64: 128, 128>}, {pipeline_mode = #tpu.pipeline_mode<synchronous>, transform_indices = @transform_5, window_bounds = array<i64: 1, 128>}, {pipeline_mode = #tpu.pipeline_mode<synchronous>, transform_indices = @transform_6, window_bounds = array<i64: 1, 128>}, {pipeline_mode = #tpu.pipeline_mode<synchronous>, transform_indices = @transform_7, window_bounds = array<i64: 128, 128>}, {pipeline_mode = #tpu.pipeline_mode<synchronous>, transform_indices = @transform_8, window_bounds = array<i64: 1, 128>}, {pipeline_mode = #tpu.pipeline_mode<synchronous>, transform_indices = @transform_9, window_bounds = array<i64: 16, 128>}]} {
    %c0_i32 = arith.constant 0 : i32
    %0 = arith.cmpi eq, %arg0, %c0_i32 : i32
    %1 = arith.extui %0 : i1 to i32
    %c0_i32_0 = arith.constant 0 : i32
    %2 = arith.cmpi ne, %1, %c0_i32_0 : i32
    scf.if %2 {
      %cst_10 = arith.constant 0.000000e+00 : f32
      %12 = vector.broadcast %cst_10 : f32 to vector<16x128xf32>
      %c0_11 = arith.constant 0 : index
      %c0_12 = arith.constant 0 : index
      %13 = vector.load %arg11[%c0_11, %c0_12] : memref<16x128xf32, #tpu.memory_space<vmem>>, vector<16x128xf32>
      tpu.vector_store %arg11[%c0_11, %c0_12], %12 {strides = array<i32>} : memref<16x128xf32, #tpu.memory_space<vmem>>, vector<16x128xf32>,
    } else {
    }
    %c0 = arith.constant 0 : index
    %c0_1 = arith.constant 0 : index
    %3 = vector.load %arg11[%c0, %c0_1] : memref<16x128xf32, #tpu.memory_space<vmem>>, vector<16x128xf32>
    %c0_2 = arith.constant 0 : index
    %c0_3 = arith.constant 0 : index
    %4 = vector.load %arg1[%c0_2, %c0_3] : memref<16x128xbf16, #tpu.memory_space<vmem>>, vector<16x128xbf16>
    %c0_4 = arith.constant 0 : index
    %c0_5 = arith.constant 0 : index
    %5 = vector.load %arg2[%c0_4, %c0_5] : memref<128x128xbf16, #tpu.memory_space<vmem>>, vector<128x128xbf16>
    %cst = arith.constant dense<0.000000e+00> : vector<16x128xf32>
    %6 = tpu.matmul %4, %5, %cst {dimension_numbers = #tpu.dot_dimension_numbers<[1], [0], [0], [1], [0, 0, 1, 1], [], []>} : vector<16x128xbf16>, vector<128x128xbf16>, vector<16x128xf32> -> vector<16x128xf32>
    %7 = arith.addf %3, %6 : vector<16x128xf32>
    %c0_6 = arith.constant 0 : index
    %c0_7 = arith.constant 0 : index
    %8 = vector.load %arg11[%c0_6, %c0_7] : memref<16x128xf32, #tpu.memory_space<vmem>>, vector<16x128xf32>
    tpu.vector_store %arg11[%c0_6, %c0_7], %7 {strides = array<i32>} : memref<16x128xf32, #tpu.memory_space<vmem>>, vector<16x128xf32>,
    %c0_i32_8 = arith.constant 0 : i32
    %9 = arith.cmpi eq, %arg0, %c0_i32_8 : i32
    %10 = arith.extui %9 : i1 to i32
    %c0_i32_9 = arith.constant 0 : i32
    %11 = arith.cmpi ne, %10, %c0_i32_9 : i32
    scf.if %11 {
      %c0_10 = arith.constant 0 : index
      %c0_11 = arith.constant 0 : index
      %12 = vector.load %arg11[%c0_10, %c0_11] : memref<16x128xf32, #tpu.memory_space<vmem>>, vector<16x128xf32>
      %cst_12 = arith.constant dense<0.000000e+00> : vector<128xf32>
      %13 = vector.multi_reduction <add>, %12, %cst_12 [0] : vector<16x128xf32> to vector<128xf32>
      %14 = vector.shape_cast %13 : vector<128xf32> to vector<1x128xf32>
      %15 = arith.mulf %12, %12 : vector<16x128xf32>
      %cst_13 = arith.constant dense<0.000000e+00> : vector<128xf32>
      %16 = vector.multi_reduction <add>, %15, %cst_13 [0] : vector<16x128xf32> to vector<128xf32>
      %17 = vector.shape_cast %16 : vector<128xf32> to vector<1x128xf32>
      %cst_14 = arith.constant 6.250000e-02 : f32
      %18 = vector.broadcast %cst_14 : f32 to vector<1x128xf32>
      %19 = arith.mulf %14, %18 : vector<1x128xf32>
      %cst_15 = arith.constant 6.250000e-02 : f32
      %20 = vector.broadcast %cst_15 : f32 to vector<1x128xf32>
      %21 = arith.mulf %17, %20 : vector<1x128xf32>
      %22 = arith.mulf %19, %19 : vector<1x128xf32>
      %23 = arith.subf %21, %22 : vector<1x128xf32>
      %cst_16 = arith.constant 0.000000e+00 : f32
      %24 = vector.broadcast %cst_16 : f32 to vector<1x128xf32>
      %25 = arith.maximumf %23, %24 : vector<1x128xf32>
      %c0_17 = arith.constant 0 : index
      %c0_18 = arith.constant 0 : index
      %26 = vector.load %arg3[%c0_17, %c0_18] : memref<1x128xf32, #tpu.memory_space<vmem>>, vector<1x128xf32>
      %cst_19 = arith.constant 9.99999974E-6 : f32
      %27 = vector.broadcast %cst_19 : f32 to vector<1x128xf32>
      %28 = arith.addf %25, %27 : vector<1x128xf32>
      %29 = math.rsqrt %28 : vector<1x128xf32>
      %30 = arith.mulf %26, %29 : vector<1x128xf32>
      %c0_20 = arith.constant 0 : index
      %c0_21 = arith.constant 0 : index
      %31 = vector.load %arg4[%c0_20, %c0_21] : memref<1x128xf32, #tpu.memory_space<vmem>>, vector<1x128xf32>
      %32 = arith.mulf %19, %30 : vector<1x128xf32>
      %33 = arith.subf %31, %32 : vector<1x128xf32>
      %34 = vector.broadcast %30 : vector<1x128xf32> to vector<16x128xf32>
      %35 = arith.mulf %12, %34 : vector<16x128xf32>
      %36 = vector.broadcast %33 : vector<1x128xf32> to vector<16x128xf32>
      %37 = arith.addf %35, %36 : vector<16x128xf32>
      %cst_22 = arith.constant 0.000000e+00 : f32
      %38 = vector.broadcast %cst_22 : f32 to vector<16x128xf32>
      %39 = arith.maximumf %37, %38 : vector<16x128xf32>
      %40 = arith.truncf %39 : vector<16x128xf32> to vector<16x128xbf16>
      %c0_23 = arith.constant 0 : index
      %c0_24 = arith.constant 0 : index
      %41 = vector.load %arg5[%c0_23, %c0_24] : memref<128x128xbf16, #tpu.memory_space<vmem>>, vector<128x128xbf16>
      %cst_25 = arith.constant dense<0.000000e+00> : vector<16x128xf32>
      %42 = tpu.matmul %40, %41, %cst_25 {dimension_numbers = #tpu.dot_dimension_numbers<[1], [0], [0], [1], [0, 0, 1, 1], [], []>} : vector<16x128xbf16>, vector<128x128xbf16>, vector<16x128xf32> -> vector<16x128xf32>
      %cst_26 = arith.constant dense<0.000000e+00> : vector<128xf32>
      %43 = vector.multi_reduction <add>, %42, %cst_26 [0] : vector<16x128xf32> to vector<128xf32>
      %44 = vector.shape_cast %43 : vector<128xf32> to vector<1x128xf32>
      %45 = arith.mulf %42, %42 : vector<16x128xf32>
      %cst_27 = arith.constant dense<0.000000e+00> : vector<128xf32>
      %46 = vector.multi_reduction <add>, %45, %cst_27 [0] : vector<16x128xf32> to vector<128xf32>
      %47 = vector.shape_cast %46 : vector<128xf32> to vector<1x128xf32>
      %cst_28 = arith.constant 6.250000e-02 : f32
      %48 = vector.broadcast %cst_28 : f32 to vector<1x128xf32>
      %49 = arith.mulf %44, %48 : vector<1x128xf32>
      %cst_29 = arith.constant 6.250000e-02 : f32
      %50 = vector.broadcast %cst_29 : f32 to vector<1x128xf32>
      %51 = arith.mulf %47, %50 : vector<1x128xf32>
      %52 = arith.mulf %49, %49 : vector<1x128xf32>
      %53 = arith.subf %51, %52 : vector<1x128xf32>
      %cst_30 = arith.constant 0.000000e+00 : f32
      %54 = vector.broadcast %cst_30 : f32 to vector<1x128xf32>
      %55 = arith.maximumf %53, %54 : vector<1x128xf32>
      %c0_31 = arith.constant 0 : index
      %c0_32 = arith.constant 0 : index
      %56 = vector.load %arg6[%c0_31, %c0_32] : memref<1x128xf32, #tpu.memory_space<vmem>>, vector<1x128xf32>
      %cst_33 = arith.constant 9.99999974E-6 : f32
      %57 = vector.broadcast %cst_33 : f32 to vector<1x128xf32>
      %58 = arith.addf %55, %57 : vector<1x128xf32>
      %59 = math.rsqrt %58 : vector<1x128xf32>
      %60 = arith.mulf %56, %59 : vector<1x128xf32>
      %c0_34 = arith.constant 0 : index
      %c0_35 = arith.constant 0 : index
      %61 = vector.load %arg7[%c0_34, %c0_35] : memref<1x128xf32, #tpu.memory_space<vmem>>, vector<1x128xf32>
      %62 = arith.mulf %49, %60 : vector<1x128xf32>
      %63 = arith.subf %61, %62 : vector<1x128xf32>
      %64 = vector.broadcast %60 : vector<1x128xf32> to vector<16x128xf32>
      %65 = arith.mulf %42, %64 : vector<16x128xf32>
      %66 = vector.broadcast %63 : vector<1x128xf32> to vector<16x128xf32>
      %67 = arith.addf %65, %66 : vector<16x128xf32>
      %cst_36 = arith.constant 0.000000e+00 : f32
      %68 = vector.broadcast %cst_36 : f32 to vector<16x128xf32>
      %69 = arith.maximumf %67, %68 : vector<16x128xf32>
      %70 = arith.truncf %69 : vector<16x128xf32> to vector<16x128xbf16>
      %c0_37 = arith.constant 0 : index
      %c0_38 = arith.constant 0 : index
      %71 = vector.load %arg8[%c0_37, %c0_38] : memref<128x128xbf16, #tpu.memory_space<vmem>>, vector<128x128xbf16>
      %cst_39 = arith.constant dense<0.000000e+00> : vector<16x128xf32>
      %72 = tpu.matmul %70, %71, %cst_39 {dimension_numbers = #tpu.dot_dimension_numbers<[1], [0], [0], [1], [0, 0, 1, 1], [], []>} : vector<16x128xbf16>, vector<128x128xbf16>, vector<16x128xf32> -> vector<16x128xf32>
      %c0_40 = arith.constant 0 : index
      %c0_41 = arith.constant 0 : index
      %73 = vector.load %arg9[%c0_40, %c0_41] : memref<1x128xf32, #tpu.memory_space<vmem>>, vector<1x128xf32>
      %74 = vector.broadcast %73 : vector<1x128xf32> to vector<16x128xf32>
      %75 = arith.addf %72, %74 : vector<16x128xf32>
      %c0_42 = arith.constant 0 : index
      %c0_43 = arith.constant 0 : index
      %76 = vector.load %arg10[%c0_42, %c0_43] : memref<16x128xf32, #tpu.memory_space<vmem>>, vector<16x128xf32>
      tpu.vector_store %arg10[%c0_42, %c0_43], %75 {strides = array<i32>} : memref<16x128xf32, #tpu.memory_space<vmem>>, vector<16x128xf32>,
    } else {
    }
    return
  }
  func.func @transform_0(%arg0: i32) -> (i32, i32) {
    %c0_i32 = arith.constant 0 : i32
    %c0_i32_0 = arith.constant 0 : i32
    return %c0_i32, %arg0 : i32, i32
  }
  func.func @transform_1(%arg0: i32) -> (i32, i32) {
    %c0_i32 = arith.constant 0 : i32
    %c0_i32_0 = arith.constant 0 : i32
    return %arg0, %c0_i32 : i32, i32
  }
  func.func @transform_2(%arg0: i32) -> (i32, i32) {
    %c0_i32 = arith.constant 0 : i32
    %c0_i32_0 = arith.constant 0 : i32
    %c0_i32_1 = arith.constant 0 : i32
    return %c0_i32, %c0_i32_0 : i32, i32
  }
  func.func @transform_3(%arg0: i32) -> (i32, i32) {
    %c0_i32 = arith.constant 0 : i32
    %c0_i32_0 = arith.constant 0 : i32
    %c0_i32_1 = arith.constant 0 : i32
    return %c0_i32, %c0_i32_0 : i32, i32
  }
  func.func @transform_4(%arg0: i32) -> (i32, i32) {
    %c0_i32 = arith.constant 0 : i32
    %c0_i32_0 = arith.constant 0 : i32
    %c0_i32_1 = arith.constant 0 : i32
    return %c0_i32, %c0_i32_0 : i32, i32
  }
  func.func @transform_5(%arg0: i32) -> (i32, i32) {
    %c0_i32 = arith.constant 0 : i32
    %c0_i32_0 = arith.constant 0 : i32
    %c0_i32_1 = arith.constant 0 : i32
    return %c0_i32, %c0_i32_0 : i32, i32
  }
  func.func @transform_6(%arg0: i32) -> (i32, i32) {
    %c0_i32 = arith.constant 0 : i32
    %c0_i32_0 = arith.constant 0 : i32
    %c0_i32_1 = arith.constant 0 : i32
    return %c0_i32, %c0_i32_0 : i32, i32
  }
  func.func @transform_7(%arg0: i32) -> (i32, i32) {
    %c0_i32 = arith.constant 0 : i32
    %c0_i32_0 = arith.constant 0 : i32
    %c0_i32_1 = arith.constant 0 : i32
    return %c0_i32, %c0_i32_0 : i32, i32
  }
  func.func @transform_8(%arg0: i32) -> (i32, i32) {
    %c0_i32 = arith.constant 0 : i32
    %c0_i32_0 = arith.constant 0 : i32
    %c0_i32_1 = arith.constant 0 : i32
    return %c0_i32, %c0_i32_0 : i32, i32
  }
  func.func @transform_9(%arg0: i32) -> (i32, i32) {
    %c0_i32 = arith.constant 0 : i32
    %c0_i32_0 = arith.constant 0 : i32
    %c0_i32_1 = arith.constant 0 : i32
    return %c0_i32, %c0_i32_0 : i32, i32
  }
}

</mosaic_0001>

<llo_original>
// kernel: tpu_custom_call.1
$region0: #{tpu_custom_call.1}
  #allocation0 [shape = 'u32[]', space=smem, size = 0x4, offset = 0x4, fixed_abs, tag = 'smem constant byte address 0x4 - core index']
  #allocation1 [shape = 'u32[144,128]{1,0:T(1,128)}', space=vmem, size = 0x12000, scoped, tag = 'internal scratch']
  #allocation2 [shape = 'f32[16,128]{1,0:T(8,128)}', space=vmem, size = 0x2000, scoped, tag = 'scratch operand']
  %s0 = inlined_call_operand.hbm [shape: bf16[16,128], index: 0, kind: input, shape index: {}]
  %s1 = inlined_call_operand.hbm [shape: bf16[128,128], index: 1, kind: input, shape index: {}]
  %s2 = inlined_call_operand.vmem [shape: f32[1,128], index: 2, kind: input, shape index: {}]
  %s3 = inlined_call_operand.vmem [shape: f32[1,128], index: 3, kind: input, shape index: {}]
  %s4 = inlined_call_operand.hbm [shape: bf16[128,128], index: 4, kind: input, shape index: {}]
  %s5 = inlined_call_operand.vmem [shape: f32[1,128], index: 5, kind: input, shape index: {}]
  %s6 = inlined_call_operand.vmem [shape: f32[1,128], index: 6, kind: input, shape index: {}]
  %s7 = inlined_call_operand.hbm [shape: bf16[128,128], index: 7, kind: input, shape index: {}]
  %s8 = inlined_call_operand.vmem [shape: f32[1,128], index: 8, kind: input, shape index: {}]
  %s9 = inlined_call_operand.hbm [shape: f32[16,128], index: 9, kind: output, shape index: {}]
  %s10 = sld [smem:[#allocation0]]
  $region70: #{tpu_custom_call.1} parent=0
    _
  %s12 = ssub.s32 1, %s10
  %s13 = scalar_select 0, %s12, %s10
  $region1: #{tpu_custom_call.1} parent=0
    #allocation3 [shape = 'u8[4096]{0}', space=vmem, size = 0x1000, scoped, tag = 'input window, operand 0, single buffered']
    #allocation4 [shape = 's32[1]{0}', space=sflag, size = 0x4, scoped, tag = 'scoped memory for tpu_custom_call.1']
    #allocation5 [shape = 's32[1]{0}', space=sflag, size = 0x4, scoped, tag = 'scoped memory for tpu_custom_call.1']
    #allocation6 [shape = 'u8[32768]{0}', space=vmem, size = 0x8000, scoped, tag = 'input window, operand 1, single buffered']
    #allocation7 [shape = 's32[1]{0}', space=sflag, size = 0x4, scoped, tag = 'scoped memory for tpu_custom_call.1']
    #allocation8 [shape = 'u8[32768]{0}', space=vmem, size = 0x8000, scoped, tag = 'input window, operand 4, single buffered']
    #allocation9 [shape = 'u8[32768]{0}', space=vmem, size = 0x8000, scoped, tag = 'input window, operand 7, single buffered']
    #allocation10 [shape = 's32[1]{0}', space=sflag, size = 0x4, scoped, tag = 'scoped memory for tpu_custom_call.1']
    #allocation11 [shape = 'u8[8192]{0}', space=vmem, size = 0x2000, scoped, tag = 'output window, operand 0, single buffered']
    %14 = vsyncpa [#allocation4], 0
    %15 = vsyncpa [#allocation7], 0
    %16 = vsyncpa [#allocation10], 0
    %17 = vsyncpa [#allocation5], 0
    // Predicated region
    $region2: #{tpu_custom_call.1} parent=1 // pred_check
      _
    $region3: #{tpu_custom_call.1} parent=1 // pred_check_branch
      %19 = sbr.rel (0) target = $region5
    $region4: #{tpu_custom_call.1} parent=1 // pred_region
      %s21 = ssub.s32 128, 128
      %22 = vsyncadd [#allocation4], %s21
      %s23 = sshll.u32 [#allocation3], 4
      %s24 = int_to_ptr.vmem [resolvable:$true] %s23
      %29 = dma.hbm_to_vmem [thread:$0]  %s0, 128, %s24, [#allocation4], 64, 64, 4
    $region5: #{tpu_custom_call.1} parent=1 // pred_fallthru
      _
    // Predicated region
    $region6: #{tpu_custom_call.1} parent=1 // pred_check
      _
    $region7: #{tpu_custom_call.1} parent=1 // pred_check_branch
      %31 = sbr.rel (0) target = $region9
    $region8: #{tpu_custom_call.1} parent=1 // pred_region
      %s33 = ssub.s32 1024, 1024
      %34 = vsyncadd [#allocation7], %s33
      %s35 = sshll.u32 [#allocation6], 4
      %s36 = int_to_ptr.vmem [resolvable:$true] %s35
      %41 = dma.hbm_to_vmem [thread:$0]  %s1, 1024, %s36, [#allocation7], 64, 64, 4
    $region9: #{tpu_custom_call.1} parent=1 // pred_fallthru
      _
    // Predicated region
    $region10: #{tpu_custom_call.1} parent=1 // pred_check
      _
    $region11: #{tpu_custom_call.1} parent=1 // pred_check_branch
      %43 = sbr.rel (0) target = $region13
    $region12: #{tpu_custom_call.1} parent=1 // pred_region
      _
    $region13: #{tpu_custom_call.1} parent=1 // pred_fallthru
      _
    // Predicated region
    $region14: #{tpu_custom_call.1} parent=1 // pred_check
      _
    $region15: #{tpu_custom_call.1} parent=1 // pred_check_branch
      %45 = sbr.rel (0) target = $region17
    $region16: #{tpu_custom_call.1} parent=1 // pred_region
      _
    $region17: #{tpu_custom_call.1} parent=1 // pred_fallthru
      _
    // Predicated region
    $region18: #{tpu_custom_call.1} parent=1 // pred_check
      _
    $region19: #{tpu_custom_call.1} parent=1 // pred_check_branch
      %47 = sbr.rel (0) target = $region21
    $region20: #{tpu_custom_call.1} parent=1 // pred_region
      %s49 = ssub.s32 1024, 1024
      %50 = vsyncadd [#allocation7], %s49
      %s51 = sshll.u32 [#allocation8], 4
      %s52 = int_to_ptr.vmem [resolvable:$true] %s51
      %57 = dma.hbm_to_vmem [thread:$0]  %s4, 1024, %s52, [#allocation7], 64, 64, 4
    $region21: #{tpu_custom_call.1} parent=1 // pred_fallthru
      _
    // Predicated region
    $region22: #{tpu_custom_call.1} parent=1 // pred_check
      _
    $region23: #{tpu_custom_call.1} parent=1 // pred_check_branch
      %59 = sbr.rel (0) target = $region25
    $region24: #{tpu_custom_call.1} parent=1 // pred_region
      _
    $region25: #{tpu_custom_call.1} parent=1 // pred_fallthru
      _
    // Predicated region
    $region26: #{tpu_custom_call.1} parent=1 // pred_check
      _
    $region27: #{tpu_custom_call.1} parent=1 // pred_check_branch
      %61 = sbr.rel (0) target = $region29
    $region28: #{tpu_custom_call.1} parent=1 // pred_region
      _
    $region29: #{tpu_custom_call.1} parent=1 // pred_fallthru
      _
    // Predicated region
    $region30: #{tpu_custom_call.1} parent=1 // pred_check
      _
    $region31: #{tpu_custom_call.1} parent=1 // pred_check_branch
      %63 = sbr.rel (0) target = $region33
    $region32: #{tpu_custom_call.1} parent=1 // pred_region
      %s65 = ssub.s32 1024, 1024
      %66 = vsyncadd [#allocation10], %s65
      %s67 = sshll.u32 [#allocation9], 4
      %s68 = int_to_ptr.vmem [resolvable:$true] %s67
      %73 = dma.hbm_to_vmem [thread:$0]  %s7, 1024, %s68, [#allocation10], 64, 64, 4
    $region33: #{tpu_custom_call.1} parent=1 // pred_fallthru
      _
    // Predicated region
    $region34: #{tpu_custom_call.1} parent=1 // pred_check
      _
    $region35: #{tpu_custom_call.1} parent=1 // pred_check_branch
      %75 = sbr.rel (0) target = $region37
    $region36: #{tpu_custom_call.1} parent=1 // pred_region
      _
    $region37: #{tpu_custom_call.1} parent=1 // pred_fallthru
      _
    // Predicated region
    $region38: #{tpu_custom_call.1} parent=1 // pred_check
      _
    $region39: #{tpu_custom_call.1} parent=1 // pred_check_branch
      %77 = sbr.rel (0) target = $region41
    $region40: #{tpu_custom_call.1} parent=1 // pred_region
      %78 = dma.done [#allocation4], 128
    $region41: #{tpu_custom_call.1} parent=1 // pred_fallthru
      _
    // Predicated region
    $region42: #{tpu_custom_call.1} parent=1 // pred_check
      _
    $region43: #{tpu_custom_call.1} parent=1 // pred_check_branch
      %80 = sbr.rel (0) target = $region45
    $region44: #{tpu_custom_call.1} parent=1 // pred_region
      %81 = dma.done [#allocation7], 1024
    $region45: #{tpu_custom_call.1} parent=1 // pred_fallthru
      _
    // Predicated region
    $region46: #{tpu_custom_call.1} parent=1 // pred_check
      _
    $region47: #{tpu_custom_call.1} parent=1 // pred_check_branch
      %83 = sbr.rel (0) target = $region49
    $region48: #{tpu_custom_call.1} parent=1 // pred_region
      %84 = dma.done [#allocation7], 1024
    $region49: #{tpu_custom_call.1} parent=1 // pred_fallthru
      _
    // Predicated region
    $region50: #{tpu_custom_call.1} parent=1 // pred_check
      _
    $region51: #{tpu_custom_call.1} parent=1 // pred_check_branch
      %86 = sbr.rel (0) target = $region53
    $region52: #{tpu_custom_call.1} parent=1 // pred_region
      %87 = dma.done [#allocation10], 1024
    $region53: #{tpu_custom_call.1} parent=1 // pred_fallthru
      _
    %p89 = scmp.eq.s32.totalorder 0, 0
    // Predicated region
    $region54: #{tpu_custom_call.1} parent=1 // pred_check
      %p90 = pneg %p89
    $region55: #{tpu_custom_call.1} parent=1 // pred_check_branch
      %92 = sbr.rel (%p90) target = $region57
    $region56: #{tpu_custom_call.1} parent=1 // pred_region
      %93 = vst [vmem:[#allocation2] sm:$0xff] 0.0
      %94 = vst [vmem:[#allocation2 + $0x8] sm:$0xff] 0.0
    $region57: #{tpu_custom_call.1} parent=1 // pred_fallthru
      _
    %v95 = vld [vmem:[#allocation2] sm:$0xff]
    %v96 = vld [vmem:[#allocation2 + $0x8] sm:$0xff]
    %v97 = vld [vmem:[#allocation3] sm:$0xf]
    %v98 = vld [vmem:[#allocation3 + $0x4] sm:$0xf]
    %v99 = vld [vmem:[#allocation6] sm:$0xf]
    %v100 = vld [vmem:[#allocation6 + $0x4] sm:$0xf]
    %v101 = vld [vmem:[#allocation6 + $0x8] sm:$0xf]
    %v102 = vld [vmem:[#allocation6 + $0xc] sm:$0xf]
    %v103 = vld [vmem:[#allocation6 + $0x10] sm:$0xf]
    %v104 = vld [vmem:[#allocation6 + $0x14] sm:$0xf]
    %v105 = vld [vmem:[#allocation6 + $0x18] sm:$0xf]
    %v106 = vld [vmem:[#allocation6 + $0x1c] sm:$0xf]
    %v107 = vld [vmem:[#allocation6 + $0x20] sm:$0xf]
    %v108 = vld [vmem:[#allocation6 + $0x24] sm:$0xf]
    %v109 = vld [vmem:[#allocation6 + $0x28] sm:$0xf]
    %v110 = vld [vmem:[#allocation6 + $0x2c] sm:$0xf]
    %v111 = vld [vmem:[#allocation6 + $0x30] sm:$0xf]
    %v112 = vld [vmem:[#allocation6 + $0x34] sm:$0xf]
    %v113 = vld [vmem:[#allocation6 + $0x38] sm:$0xf]
    %v114 = vld [vmem:[#allocation6 + $0x3c] sm:$0xf]
    %v117 = vunpack.c.l.b16 %v97
    %v118 = vunpack.c.l.b16 %v98
    %v119 = vpack.c.b16 %v118, %v117
    %v137 = vunpack.c.l.b16 %v99
    %v138 = vunpack.c.l.b16 %v100
    %v139 = vunpack.c.l.b16 %v101
    %v140 = vunpack.c.l.b16 %v102
    %v141 = vunpack.c.l.b16 %v103
    %v142 = vunpack.c.l.b16 %v104
    %v143 = vunpack.c.l.b16 %v105
    %v144 = vunpack.c.l.b16 %v106
    %v145 = vunpack.c.l.b16 %v107
    %v146 = vunpack.c.l.b16 %v108
    %v147 = vunpack.c.l.b16 %v109
    %v148 = vunpack.c.l.b16 %v110
    %v149 = vunpack.c.l.b16 %v111
    %v150 = vunpack.c.l.b16 %v112
    %v151 = vunpack.c.l.b16 %v113
    %v152 = vunpack.c.l.b16 %v114
    %v153 = vpack.c.b16 %v138, %v137
    %v154 = vpack.c.b16 %v140, %v139
    %v155 = vpack.c.b16 %v142, %v141
    %v156 = vpack.c.b16 %v144, %v143
    %v157 = vpack.c.b16 %v146, %v145
    %v158 = vpack.c.b16 %v148, %v147
    %v159 = vpack.c.b16 %v150, %v149
    %v160 = vpack.c.b16 %v152, %v151
    %169 = vmatprep.subr.bf16.mxu0 0
    %170 = vmatpush1.bf16.msra.mxu0 %v160
    %171 = vmatprep.subr.bf16.mxu0 0
    %172 = vmatpush1.bf16.msra.mxu0 %v159
    %173 = vmatprep.subr.bf16.mxu0 0
    %174 = vmatpush1.bf16.msra.mxu0 %v158
    %175 = vmatprep.subr.bf16.mxu0 0
    %176 = vmatpush1.bf16.msra.mxu0 %v157
    %177 = vmatprep.subr.bf16.mxu0 0
    %178 = vmatpush1.bf16.msra.mxu0 %v156
    %179 = vmatprep.subr.bf16.mxu0 0
    %180 = vmatpush1.bf16.msra.mxu0 %v155
    %181 = vmatprep.subr.bf16.mxu0 0
    %182 = vmatpush1.bf16.msra.mxu0 %v154
    %183 = vmatprep.subr.bf16.mxu0 0
    %184 = vmatpush1.bf16.msra.mxu0 %v153
    %185 = vmatprep.subr.bf16.mxu0 0
    %186 = vmatpush2.bf16.msra.mxu0 0
    %187 = vmatprep.subr.bf16.mxu0 0
    %188 = vmatpush2.bf16.msra.mxu0 0
    %189 = vmatprep.subr.bf16.mxu0 0
    %190 = vmatpush2.bf16.msra.mxu0 0
    %191 = vmatprep.subr.bf16.mxu0 0
    %192 = vmatpush2.bf16.msra.mxu0 0
    %193 = vmatprep.subr.bf16.mxu0 0
    %194 = vmatpush2.bf16.msra.mxu0 0
    %195 = vmatprep.subr.bf16.mxu0 0
    %196 = vmatpush2.bf16.msra.mxu0 0
    %197 = vmatprep.subr.bf16.mxu0 0
    %198 = vmatpush2.bf16.msra.mxu0 0
    %199 = vmatprep.subr.bf16.mxu0 0
    %200 = vmatpush2.bf16.msra.mxu0 0
    %201 = vmatprep.mubr.bf16.mxu0 0
    %202 = vmatmul.mubr.bf16.gmra.mxu0 %v119
    %v203 = vpop.f32.mrf.mxu0
    %v204 = vadd.f32 0.0, %v203
    %v205 = vpop.f32.mrf.mxu0
    %v206 = vpop.f32.mrf.mxu0
    %v207 = vadd.f32 0.0, %v206
    %v208 = vpop.f32.mrf.mxu0
    %209 = vdwg.mxu0
    %v210 = vadd.f32 %v95, %v204
    %v211 = vadd.f32 %v96, %v207
    %212 = vst [vmem:[#allocation2] sm:$0xff] %v210
    %213 = vst [vmem:[#allocation2 + $0x8] sm:$0xff] %v211
    // Predicated region
    $region58: #{tpu_custom_call.1} parent=1 // pred_check
      %p214 = pneg %p89
    $region59: #{tpu_custom_call.1} parent=1 // pred_check_branch
      %216 = sbr.rel (%p214) target = $region61
    $region60: #{tpu_custom_call.1} parent=1 // pred_region
      %v217 = vld [vmem:[#allocation2] sm:$0xff]
      %v218 = vld [vmem:[#allocation2 + $0x8] sm:$0xff]
      %v219 = vadd.f32 %v217, %v218
      %v220 = vrot.slane %v219, 4
      %v221 = vadd.f32 %v219, %v220
      %v222 = vrot.slane %v221, 2
      %v223 = vadd.f32 %v221, %v222
      %v224 = vrot.slane %v223, 1
      %v225 = vadd.f32 %v223, %v224
      %v226 = vmul.f32 %v217, %v217
      %v227 = vmul.f32 %v218, %v218
      %v228 = vadd.f32 %v226, %v227
      %v229 = vrot.slane %v228, 4
      %v230 = vadd.f32 %v228, %v229
      %v231 = vrot.slane %v230, 2
      %v232 = vadd.f32 %v230, %v231
      %v233 = vrot.slane %v232, 1
      %v234 = vadd.f32 %v232, %v233
      %v235 = vmul.f32 %v225, 0.0625
      %v236 = vmul.f32 %v234, 0.0625
      %v237 = vmul.f32 %v235, %v235
      %v238 = vsub.f32 %v236, %v237
      %v239 = vmax.f32 %v238, 0.0
      %v240 = vld [vmem:[%s2] sm:$0x1]
      %v241 = vadd.f32 %v239, 1e-05
      %v242 = vrsqrt.pop %v241
      %v243 = vmul.f32 %v240, %v242
      %v244 = vld [vmem:[%s3] sm:$0x1]
      %v245 = vmul.f32 %v235, %v243
      %v246 = vsub.f32 %v244, %v245
      %v248 = vlaneseq
      %v249 = vshrl.u32 %v248, 7
      %v250 = vsub.s32 0, %v249
      %v251 = vrot.slane %v243, %v250
      %v253 = vmul.f32 %v217, %v251
      %v254 = vmul.f32 %v218, %v251
      %v256 = vlaneseq
      %v257 = vshrl.u32 %v256, 7
      %v258 = vsub.s32 0, %v257
      %v259 = vrot.slane %v246, %v258
      %v261 = vadd.f32 %v253, %v259
      %v262 = vadd.f32 %v254, %v259
      %v263 = vmax.f32 %v261, 0.0
      %v264 = vmax.f32 %v262, 0.0
      %v265 = vpack.c.bf16 %v264, %v263
      %v266 = vld [vmem:[#allocation8] sm:$0xf]
      %v267 = vld [vmem:[#allocation8 + $0x4] sm:$0xf]
      %v268 = vld [vmem:[#allocation8 + $0x8] sm:$0xf]
      %v269 = vld [vmem:[#allocation8 + $0xc] sm:$0xf]
      %v270 = vld [vmem:[#allocation8 + $0x10] sm:$0xf]
      %v271 = vld [vmem:[#allocation8 + $0x14] sm:$0xf]
      %v272 = vld [vmem:[#allocation8 + $0x18] sm:$0xf]
      %v273 = vld [vmem:[#allocation8 + $0x1c] sm:$0xf]
      %v274 = vld [vmem:[#allocation8 + $0x20] sm:$0xf]
      %v275 = vld [vmem:[#allocation8 + $0x24] sm:$0xf]
      %v276 = vld [vmem:[#allocation8 + $0x28] sm:$0xf]
      %v277 = vld [vmem:[#allocation8 + $0x2c] sm:$0xf]
      %v278 = vld [vmem:[#allocation8 + $0x30] sm:$0xf]
      %v279 = vld [vmem:[#allocation8 + $0x34] sm:$0xf]
      %v280 = vld [vmem:[#allocation8 + $0x38] sm:$0xf]
      %v281 = vld [vmem:[#allocation8 + $0x3c] sm:$0xf]
      %v298 = vunpack.c.l.b16 %v266
      %v299 = vunpack.c.l.b16 %v267
      %v300 = vunpack.c.l.b16 %v268
      %v301 = vunpack.c.l.b16 %v269
      %v302 = vunpack.c.l.b16 %v270
      %v303 = vunpack.c.l.b16 %v271
      %v304 = vunpack.c.l.b16 %v272
      %v305 = vunpack.c.l.b16 %v273
      %v306 = vunpack.c.l.b16 %v274
      %v307 = vunpack.c.l.b16 %v275
      %v308 = vunpack.c.l.b16 %v276
      %v309 = vunpack.c.l.b16 %v277
      %v310 = vunpack.c.l.b16 %v278
      %v311 = vunpack.c.l.b16 %v279
      %v312 = vunpack.c.l.b16 %v280
      %v313 = vunpack.c.l.b16 %v281
      %v314 = vpack.c.b16 %v299, %v298
      %v315 = vpack.c.b16 %v301, %v300
      %v316 = vpack.c.b16 %v303, %v302
      %v317 = vpack.c.b16 %v305, %v304
      %v318 = vpack.c.b16 %v307, %v306
      %v319 = vpack.c.b16 %v309, %v308
      %v320 = vpack.c.b16 %v311, %v310
      %v321 = vpack.c.b16 %v313, %v312
      %330 = vmatprep.subr.bf16.mxu0 0
      %331 = vmatpush1.bf16.msra.mxu0 %v321
      %332 = vmatprep.subr.bf16.mxu0 0
      %333 = vmatpush1.bf16.msra.mxu0 %v320
      %334 = vmatprep.subr.bf16.mxu0 0
      %335 = vmatpush1.bf16.msra.mxu0 %v319
      %336 = vmatprep.subr.bf16.mxu0 0
      %337 = vmatpush1.bf16.msra.mxu0 %v318
      %338 = vmatprep.subr.bf16.mxu0 0
      %339 = vmatpush1.bf16.msra.mxu0 %v317
      %340 = vmatprep.subr.bf16.mxu0 0
      %341 = vmatpush1.bf16.msra.mxu0 %v316
      %342 = vmatprep.subr.bf16.mxu0 0
      %343 = vmatpush1.bf16.msra.mxu0 %v315
      %344 = vmatprep.subr.bf16.mxu0 0
      %345 = vmatpush1.bf16.msra.mxu0 %v314
      %346 = vmatprep.subr.bf16.mxu0 0
      %347 = vmatpush2.bf16.msra.mxu0 0
      %348 = vmatprep.subr.bf16.mxu0 0
      %349 = vmatpush2.bf16.msra.mxu0 0
      %350 = vmatprep.subr.bf16.mxu0 0
      %351 = vmatpush2.bf16.msra.mxu0 0
      %352 = vmatprep.subr.bf16.mxu0 0
      %353 = vmatpush2.bf16.msra.mxu0 0
      %354 = vmatprep.subr.bf16.mxu0 0
      %355 = vmatpush2.bf16.msra.mxu0 0
      %356 = vmatprep.subr.bf16.mxu0 0
      %357 = vmatpush2.bf16.msra.mxu0 0
      %358 = vmatprep.subr.bf16.mxu0 0
      %359 = vmatpush2.bf16.msra.mxu0 0
      %360 = vmatprep.subr.bf16.mxu0 0
      %361 = vmatpush2.bf16.msra.mxu0 0
      %362 = vmatprep.mubr.bf16.mxu0 0
      %363 = vmatmul.mubr.bf16.gmra.mxu0 %v265
      %v364 = vpop.f32.mrf.mxu0
      %v365 = vadd.f32 0.0, %v364
      %v366 = vpop.f32.mrf.mxu0
      %v367 = vpop.f32.mrf.mxu0
      %v368 = vadd.f32 0.0, %v367
      %v369 = vpop.f32.mrf.mxu0
      %370 = vdwg.mxu0
      %v371 = vadd.f32 %v365, %v368
      %v372 = vrot.slane %v371, 4
      %v373 = vadd.f32 %v371, %v372
      %v374 = vrot.slane %v373, 2
      %v375 = vadd.f32 %v373, %v374
      %v376 = vrot.slane %v375, 1
      %v377 = vadd.f32 %v375, %v376
      %v378 = vmul.f32 %v365, %v365
      %v379 = vmul.f32 %v368, %v368
      %v380 = vadd.f32 %v378, %v379
      %v381 = vrot.slane %v380, 4
      %v382 = vadd.f32 %v380, %v381
      %v383 = vrot.slane %v382, 2
      %v384 = vadd.f32 %v382, %v383
      %v385 = vrot.slane %v384, 1
      %v386 = vadd.f32 %v384, %v385
      %v387 = vmul.f32 %v377, 0.0625
      %v388 = vmul.f32 %v386, 0.0625
      %v389 = vmul.f32 %v387, %v387
      %v390 = vsub.f32 %v388, %v389
      %v391 = vmax.f32 %v390, 0.0
      %v392 = vld [vmem:[%s5] sm:$0x1]
      %v393 = vadd.f32 %v391, 1e-05
      %v394 = vrsqrt.pop %v393
      %v395 = vmul.f32 %v392, %v394
      %v396 = vld [vmem:[%s6] sm:$0x1]
      %v397 = vmul.f32 %v387, %v395
      %v398 = vsub.f32 %v396, %v397
      %v400 = vlaneseq
      %v401 = vshrl.u32 %v400, 7
      %v402 = vsub.s32 0, %v401
      %v403 = vrot.slane %v395, %v402
      %v405 = vmul.f32 %v365, %v403
      %v406 = vmul.f32 %v368, %v403
      %v408 = vlaneseq
      %v409 = vshrl.u32 %v408, 7
      %v410 = vsub.s32 0, %v409
      %v411 = vrot.slane %v398, %v410
      %v413 = vadd.f32 %v405, %v411
      %v414 = vadd.f32 %v406, %v411
      %v415 = vmax.f32 %v413, 0.0
      %v416 = vmax.f32 %v414, 0.0
      %v417 = vpack.c.bf16 %v416, %v415
      %v418 = vld [vmem:[#allocation9] sm:$0xf]
      %v419 = vld [vmem:[#allocation9 + $0x4] sm:$0xf]
      %v420 = vld [vmem:[#allocation9 + $0x8] sm:$0xf]
      %v421 = vld [vmem:[#allocation9 + $0xc] sm:$0xf]
      %v422 = vld [vmem:[#allocation9 + $0x10] sm:$0xf]
      %v423 = vld [vmem:[#allocation9 + $0x14] sm:$0xf]
      %v424 = vld [vmem:[#allocation9 + $0x18] sm:$0xf]
      %v425 = vld [vmem:[#allocation9 + $0x1c] sm:$0xf]
      %v426 = vld [vmem:[#allocation9 + $0x20] sm:$0xf]
      %v427 = vld [vmem:[#allocation9 + $0x24] sm:$0xf]
      %v428 = vld [vmem:[#allocation9 + $0x28] sm:$0xf]
      %v429 = vld [vmem:[#allocation9 + $0x2c] sm:$0xf]
      %v430 = vld [vmem:[#allocation9 + $0x30] sm:$0xf]
      %v431 = vld [vmem:[#allocation9 + $0x34] sm:$0xf]
      %v432 = vld [vmem:[#allocation9 + $0x38] sm:$0xf]
      %v433 = vld [vmem:[#allocation9 + $0x3c] sm:$0xf]
      %v434 = vld [vmem:[%s8] sm:$0x1]
      %v436 = vlaneseq
      %v437 = vshrl.u32 %v436, 7
      %v438 = vsub.s32 0, %v437
      %v439 = vrot.slane %v434, %v438
      %v457 = vunpack.c.l.b16 %v418
      %v458 = vunpack.c.l.b16 %v419
      %v459 = vunpack.c.l.b16 %v420
      %v460 = vunpack.c.l.b16 %v421
      %v461 = vunpack.c.l.b16 %v422
      %v462 = vunpack.c.l.b16 %v423
      %v463 = vunpack.c.l.b16 %v424
      %v464 = vunpack.c.l.b16 %v425
      %v465 = vunpack.c.l.b16 %v426
      %v466 = vunpack.c.l.b16 %v427
      %v467 = vunpack.c.l.b16 %v428
      %v468 = vunpack.c.l.b16 %v429
      %v469 = vunpack.c.l.b16 %v430
      %v470 = vunpack.c.l.b16 %v431
      %v471 = vunpack.c.l.b16 %v432
      %v472 = vunpack.c.l.b16 %v433
      %v473 = vpack.c.b16 %v458, %v457
      %v474 = vpack.c.b16 %v460, %v459
      %v475 = vpack.c.b16 %v462, %v461
      %v476 = vpack.c.b16 %v464, %v463
      %v477 = vpack.c.b16 %v466, %v465
      %v478 = vpack.c.b16 %v468, %v467
      %v479 = vpack.c.b16 %v470, %v469
      %v480 = vpack.c.b16 %v472, %v471
      %489 = vmatprep.subr.bf16.mxu0 0
      %490 = vmatpush1.bf16.msra.mxu0 %v480
      %491 = vmatprep.subr.bf16.mxu0 0
      %492 = vmatpush1.bf16.msra.mxu0 %v479
      %493 = vmatprep.subr.bf16.mxu0 0
      %494 = vmatpush1.bf16.msra.mxu0 %v478
      %495 = vmatprep.subr.bf16.mxu0 0
      %496 = vmatpush1.bf16.msra.mxu0 %v477
      %497 = vmatprep.subr.bf16.mxu0 0
      %498 = vmatpush1.bf16.msra.mxu0 %v476
      %499 = vmatprep.subr.bf16.mxu0 0
      %500 = vmatpush1.bf16.msra.mxu0 %v475
      %501 = vmatprep.subr.bf16.mxu0 0
      %502 = vmatpush1.bf16.msra.mxu0 %v474
      %503 = vmatprep.subr.bf16.mxu0 0
      %504 = vmatpush1.bf16.msra.mxu0 %v473
      %505 = vmatprep.subr.bf16.mxu0 0
      %506 = vmatpush2.bf16.msra.mxu0 0
      %507 = vmatprep.subr.bf16.mxu0 0
      %508 = vmatpush2.bf16.msra.mxu0 0
      %509 = vmatprep.subr.bf16.mxu0 0
      %510 = vmatpush2.bf16.msra.mxu0 0
      %511 = vmatprep.subr.bf16.mxu0 0
      %512 = vmatpush2.bf16.msra.mxu0 0
      %513 = vmatprep.subr.bf16.mxu0 0
      %514 = vmatpush2.bf16.msra.mxu0 0
      %515 = vmatprep.subr.bf16.mxu0 0
      %516 = vmatpush2.bf16.msra.mxu0 0
      %517 = vmatprep.subr.bf16.mxu0 0
      %518 = vmatpush2.bf16.msra.mxu0 0
      %519 = vmatprep.subr.bf16.mxu0 0
      %520 = vmatpush2.bf16.msra.mxu0 0
      %521 = vmatprep.mubr.bf16.mxu0 0
      %522 = vmatmul.mubr.bf16.gmra.mxu0 %v417
      %v523 = vpop.f32.mrf.mxu0
      %v524 = vadd.f32 %v439, %v523
      %v525 = vpop.f32.mrf.mxu0
      %v526 = vpop.f32.mrf.mxu0
      %v527 = vadd.f32 %v439, %v526
      %v528 = vpop.f32.mrf.mxu0
      %529 = vdwg.mxu0
      %530 = vst [vmem:[#allocation11] sm:$0xff] %v524
      %531 = vst [vmem:[#allocation11 + $0x8] sm:$0xff] %v527
    $region61: #{tpu_custom_call.1} parent=1 // pred_fallthru
      _
    // Predicated region
    $region62: #{tpu_custom_call.1} parent=1 // pred_check
      _
    $region63: #{tpu_custom_call.1} parent=1 // pred_check_branch
      %533 = sbr.rel (0) target = $region65
    $region64: #{tpu_custom_call.1} parent=1 // pred_region
      %s535 = ssub.s32 256, 256
      %536 = vsyncadd [#allocation5], %s535
      %s537 = sshll.u32 [#allocation11], 4
      %s538 = int_to_ptr.vmem [resolvable:$true] %s537
      %543 = dma.vmem_to_hbm [thread:$0]  %s538, 256, %s9, [#allocation5], 128, 128, 8
    $region65: #{tpu_custom_call.1} parent=1 // pred_fallthru
      _
    // Predicated region
    $region66: #{tpu_custom_call.1} parent=1 // pred_check
      _
    $region67: #{tpu_custom_call.1} parent=1 // pred_check_branch
      %545 = sbr.rel (0) target = $region69
    $region68: #{tpu_custom_call.1} parent=1 // pred_region
      %546 = dma.done [#allocation5], 256
    $region69: #{tpu_custom_call.1} parent=1 // pred_fallthru
      _
    %547 = vsyncpa [#allocation4], 1
    %548 = vsyncpa [#allocation7], 1
    %549 = vsyncpa [#allocation10], 1
    %550 = vsyncpa [#allocation5], 1

</llo_original>
